<compile_context>
chip_gen: v7x
topology: tpu7x:2x2x1
jax: 0.10.0
libtpu: 0.0.40
codegen_flags: <defaults>
</compile_context>

<pallas_src>
import math

import jax
import jax.numpy as jnp
from jax import lax
from jax.experimental import pallas as pl
from jax.experimental.pallas import tpu as pltpu


def _round_up(x, m):
    return (x + m - 1) // m * m


def _pick_tile(dim, align, max_tile):
    """Pick a tile (multiple of `align`, <= max_tile) minimizing padded extent."""
    d = _round_up(max(dim, 1), align)
    if d <= max_tile:
        return d, d
    best_t, best_pad = align, _round_up(d, align)
    for t in range(align, max_tile + 1, align):
        padded = _round_up(d, t)
        if padded < best_pad or (padded == best_pad and t > best_t):
            best_t, best_pad = t, padded
    return best_t, best_pad


def _complex_linear_kernel(x_ref, w_ref, b_ref, o_ref):
    # x_ref : [tm, tk]   tile of the interleaved-re/im activations (compute_dtype)
    # w_ref : [tk, tn]   tile of the packed [2K, 2N] weight (compute_dtype)
    # b_ref : [1,  tn]   tile of the packed [b_re | b_im] bias (float32)
    # o_ref : [tm, tn]   f32 output tile, VMEM-resident across the K (reduction) axis
    k = pl.program_id(2)

    @pl.when(k == 0)
    def _():
        # Initialize the resident output tile with the bias (added exactly once).
        o_ref[...] = jnp.broadcast_to(b_ref[...], o_ref.shape)

    # Standard [M,K] @ [K,N] contraction -> MXU stationary RHS layout, f32 accumulate.
    o_ref[...] += jnp.dot(x_ref[...], w_ref[...], preferred_element_type=jnp.float32)


def pack_complex_linear_params(w_real_view, b_real_view, *,
                               compute_dtype=jnp.bfloat16,
                               max_tn=512, max_tk=1024):
    """One-time packing of module parameters into the kernel's weight layout.

    w_real_view : [N, K, 2]  (torch.view_as_real of the complex weight)
    b_real_view : [N, 2]     (torch.view_as_real of the complex bias)
    Returns (w_cat, b_cat, meta); hoist this out of the per-call path.
    """
    out_features, in_features, _ = w_real_view.shape
    K2 = 2 * in_features
    N2 = 2 * out_features

    tk, K2p = _pick_tile(K2, 128, max_tk)
    tn, N2p = _pick_tile(N2, 128, max_tn)

    wr = w_real_view[..., 0].astype(jnp.float32)   # [N, K]
    wi = w_real_view[..., 1].astype(jnp.float32)   # [N, K]

    # [2K, N] with interleaved-K rows: row 2k = wr[:,k], row 2k+1 = -wi[:,k]
    w_left = jnp.stack([wr.T, -wi.T], axis=1).reshape(K2, out_features)
    # [2K, N] : row 2k = wi[:,k], row 2k+1 = wr[:,k]
    w_right = jnp.stack([wi.T, wr.T], axis=1).reshape(K2, out_features)
    w_cat = jnp.concatenate([w_left, w_right], axis=1)            # [2K, 2N]
    w_cat = jnp.pad(w_cat, ((0, K2p - K2), (0, N2p - N2))).astype(compute_dtype)

    b_cat = jnp.concatenate(
        [b_real_view[:, 0], b_real_view[:, 1]], axis=0).astype(jnp.float32)  # [2N]
    b_cat = jnp.pad(b_cat, (0, N2p - N2))[None, :]                # [1, 2N_p], f32

    meta = dict(in_features=in_features, out_features=out_features,
                tk=tk, tn=tn, K2p=K2p, N2p=N2p, compute_dtype=compute_dtype)
    return w_cat, b_cat, meta


def complex_linear_pallas(x, w_cat, b_cat, meta, *, max_tm=512):
    """Complex F.linear: x @ W_c^T + b_c, using pre-packed (w_cat, b_cat, meta).

    x : [..., in_features] complex64 (a real float input is treated as zero-imag).
    Returns [..., out_features] complex64.
    """
    in_features = meta["in_features"]
    out_features = meta["out_features"]
    tk, tn = meta["tk"], meta["tn"]
    K2p, N2p = meta["K2p"], meta["N2p"]
    compute_dtype = meta["compute_dtype"]

    lead_shape = x.shape[:-1]
    M = math.prod(lead_shape)
    K2 = 2 * in_features

    # Interleaved (re, im) activation columns.  XLA fuses the real/imag split,
    # stack, cast and pad into a single pass producing the (bf16) x_cat slab.
    if jnp.issubdtype(x.dtype, jnp.complexfloating):
        x_ri = jnp.stack([jnp.real(x), jnp.imag(x)], axis=-1)     # [..., K, 2]
    else:
        xr = x.astype(jnp.float32)
        x_ri = jnp.stack([xr, jnp.zeros_like(xr)], axis=-1)
    x_cat = x_ri.reshape(M, K2).astype(compute_dtype)

    tm, Mp = _pick_tile(M, 8, max_tm)
    # v7x megacore: ensure >=2 tiles along a "parallel" axis when it costs no padding
    # (halving a 16-aligned tm keeps Mp unchanged); harmless on 1-TC chips.
    if (Mp // tm) * (N2p // tn) < 2 and tm % 16 == 0:
        tm //= 2

    x_cat = jnp.pad(x_cat, ((0, Mp - M), (0, K2p - K2)))          # zero-pad: exact no-op

    grid = (Mp // tm, N2p // tn, K2p // tk)
    itemsize = jnp.dtype(compute_dtype).itemsize
    cost = pl.CostEstimate(
        flops=2 * Mp * K2p * N2p,
        transcendentals=0,
        bytes_accessed=(Mp * K2p + K2p * N2p) * itemsize + Mp * N2p * 4)

    out_cat = pl.pallas_call(
        _complex_linear_kernel,
        out_shape=jax.ShapeDtypeStruct((Mp, N2p), jnp.float32),
        grid_spec=pltpu.PrefetchScalarGridSpec(
            num_scalar_prefetch=0,
            grid=grid,
            in_specs=[
                pl.BlockSpec((tm, tk), lambda i, j, k: (i, k)),   # x_cat  [M, 2K]
                pl.BlockSpec((tk, tn), lambda i, j, k: (k, j)),   # w_cat  [2K, 2N]
                pl.BlockSpec((1, tn), lambda i, j, k: (0, j)),    # b_cat  [1, 2N]
            ],
            out_specs=pl.BlockSpec((tm, tn), lambda i, j, k: (i, j)),
        ),
        compiler_params=pltpu.CompilerParams(
            dimension_semantics=("parallel", "parallel", "arbitrary"),
            vmem_limit_bytes=32 * 1024 * 1024),
        cost_estimate=cost,
    )(x_cat, w_cat, b_cat)

    out_re = out_cat[:M, :out_features].reshape(*lead_shape, out_features)
    out_im = out_cat[:M, out_features:2 * out_features].reshape(*lead_shape, out_features)
    return lax.complex(out_re, out_im)


if __name__ == "__main__":
    # Small shapes consistent with the module: batch=2, seq=8, in=32, out=32.
    batch, seq, in_features, out_features = 2, 8, 32, 32

    key = jax.random.PRNGKey(0)
    k_xr, k_xi, k_wr, k_wi, k_br, k_bi = jax.random.split(key, 6)

    # Parameters in the same storage layout as the PyTorch module:
    #   weights: (out_features, in_features, 2), bias: (out_features, 2)
    w_real_view = jnp.stack(
        [0.1 * jax.random.normal(k_wr, (out_features, in_features), jnp.float32),
         0.1 * jax.random.normal(k_wi, (out_features, in_features), jnp.float32)],
        axis=-1)
    b_real_view = jnp.stack(
        [0.1 * jax.random.normal(k_br, (out_features,), jnp.float32),
         0.1 * jax.random.normal(k_bi, (out_features,), jnp.float32)],
        axis=-1)

    x_re = jax.random.normal(k_xr, (batch, seq, in_features), jnp.float32)
    x_im = jax.random.normal(k_xi, (batch, seq, in_features), jnp.float32)
    x = lax.complex(x_re, x_im)

    # Reference: plain complex linear (input @ W^T + b) in JAX.
    w_c = lax.complex(w_real_view[..., 0], w_real_view[..., 1])   # [N, K]
    b_c = lax.complex(b_real_view[:, 0], b_real_view[:, 1])       # [N]
    ref = jnp.einsum("bsk,nk->bsn", x, w_c) + b_c

    # Exact float32 MXU path.
    w32, b32, m32 = pack_complex_linear_params(
        w_real_view, b_real_view, compute_dtype=jnp.float32)
    out32 = jax.jit(lambda xx: complex_linear_pallas(xx, w32, b32, m32))(x)
    out32 = jax.block_until_ready(out32)
    assert out32.shape == (batch, seq, out_features)
    assert jnp.allclose(out32.real, ref.real, atol=1e-4, rtol=1e-4)
    assert jnp.allclose(out32.imag, ref.imag, atol=1e-4, rtol=1e-4)

    # Default bf16-operand path (f32 accumulation / bias / output) -- looser tolerance.
    wbf, bbf, mbf = pack_complex_linear_params(w_real_view, b_real_view)
    outbf = jax.jit(lambda xx: complex_linear_pallas(xx, wbf, bbf, mbf))(x)
    outbf = jax.block_until_ready(outbf)
    assert outbf.shape == (batch, seq, out_features)
    assert jnp.allclose(outbf.real, ref.real, atol=3e-2, rtol=3e-2)
    assert jnp.allclose(outbf.imag, ref.imag, atol=3e-2, rtol=3e-2)

    print("KERNEL_OK")
</pallas_src>

<mosaic_0001>
module attributes {stable_mosaic.version = 11 : i64} {
  func.func @_complex_linear_kernel(%arg0: i32, %arg1: i32, %arg2: i32, %arg3: memref<8x128xf32, #tpu.memory_space<vmem>>, %arg4: memref<128x128xf32, #tpu.memory_space<vmem>>, %arg5: memref<1x128xf32, #tpu.memory_space<vmem>>, %arg6: memref<8x128xf32, #tpu.memory_space<vmem>>) attributes {dimension_semantics = [#tpu.dimension_semantics<parallel>, #tpu.dimension_semantics<parallel>, #tpu.dimension_semantics<arbitrary>], iteration_bounds = array<i64: 2, 1, 1>, scalar_prefetch = 0 : i64, scratch_operands = 0 : i64, tpu.core_type = #tpu.core_type<tc>, window_params = [{transform_indices = @transform_0, window_bounds = array<i64: 8, 128>}, {transform_indices = @transform_1, window_bounds = array<i64: 128, 128>}, {transform_indices = @transform_2, window_bounds = array<i64: 1, 128>}, {transform_indices = @transform_3, window_bounds = array<i64: 8, 128>}]} {
    %c0_i32 = arith.constant 0 : i32
    %0 = arith.cmpi eq, %arg2, %c0_i32 : i32
    %1 = arith.extui %0 : i1 to i32
    %c0_i32_0 = arith.constant 0 : i32
    %2 = arith.cmpi ne, %1, %c0_i32_0 : i32
    scf.if %2 {
      %c0_8 = arith.constant 0 : index
      %c0_9 = arith.constant 0 : index
      %9 = vector.load %arg5[%c0_8, %c0_9] : memref<1x128xf32, #tpu.memory_space<vmem>>, vector<1x128xf32>
      %10 = vector.shape_cast %9 : vector<1x128xf32> to vector<1x128xf32>
      %11 = vector.broadcast %10 : vector<1x128xf32> to vector<8x128xf32>
      %c0_10 = arith.constant 0 : index
      %c0_11 = arith.constant 0 : index
      %12 = vector.load %arg6[%c0_10, %c0_11] : memref<8x128xf32, #tpu.memory_space<vmem>>, vector<8x128xf32>
      tpu.vector_store %arg6[%c0_10, %c0_11], %11 {strides = array<i32>} : memref<8x128xf32, #tpu.memory_space<vmem>>, vector<8x128xf32>,
    } else {
    }
    %c0 = arith.constant 0 : index
    %c0_1 = arith.constant 0 : index
    %3 = vector.load %arg6[%c0, %c0_1] : memref<8x128xf32, #tpu.memory_space<vmem>>, vector<8x128xf32>
    %c0_2 = arith.constant 0 : index
    %c0_3 = arith.constant 0 : index
    %4 = vector.load %arg3[%c0_2, %c0_3] : memref<8x128xf32, #tpu.memory_space<vmem>>, vector<8x128xf32>
    %c0_4 = arith.constant 0 : index
    %c0_5 = arith.constant 0 : index
    %5 = vector.load %arg4[%c0_4, %c0_5] : memref<128x128xf32, #tpu.memory_space<vmem>>, vector<128x128xf32>
    %cst = arith.constant dense<0.000000e+00> : vector<8x128xf32>
    %6 = tpu.matmul %4, %5, %cst {dimension_numbers = #tpu.dot_dimension_numbers<[1], [0], [0], [1], [0, 0, 1, 1], [], []>} : vector<8x128xf32>, vector<128x128xf32>, vector<8x128xf32> -> vector<8x128xf32>
    %7 = arith.addf %3, %6 : vector<8x128xf32>
    %c0_6 = arith.constant 0 : index
    %c0_7 = arith.constant 0 : index
    %8 = vector.load %arg6[%c0_6, %c0_7] : memref<8x128xf32, #tpu.memory_space<vmem>>, vector<8x128xf32>
    tpu.vector_store %arg6[%c0_6, %c0_7], %7 {strides = array<i32>} : memref<8x128xf32, #tpu.memory_space<vmem>>, vector<8x128xf32>,
    return
  }
  func.func @transform_0(%arg0: i32, %arg1: i32, %arg2: i32) -> (i32, i32) {
    %c0_i32 = arith.constant 0 : i32
    return %arg0, %arg2 : i32, i32
  }
  func.func @transform_1(%arg0: i32, %arg1: i32, %arg2: i32) -> (i32, i32) {
    %c0_i32 = arith.constant 0 : i32
    return %arg2, %arg1 : i32, i32
  }
  func.func @transform_2(%arg0: i32, %arg1: i32, %arg2: i32) -> (i32, i32) {
    %c0_i32 = arith.constant 0 : i32
    %c0_i32_0 = arith.constant 0 : i32
    return %c0_i32, %arg1 : i32, i32
  }
  func.func @transform_3(%arg0: i32, %arg1: i32, %arg2: i32) -> (i32, i32) {
    %c0_i32 = arith.constant 0 : i32
    return %arg0, %arg1 : i32, i32
  }
}

</mosaic_0001>

<llo_original>
// kernel: custom-call.1
$region0: #{custom-call.1}
  %s0 = inlined_call_operand.hbm [shape: c64[2,8,32], index: 0, kind: input, shape index: {}]
  %s1 = inlined_call_operand.vmem [shape: f32[2,8,32], index: 1, kind: output, shape index: {}]
  %s2 = scalar_lea.hbm %s0, 256
  $region1: #{custom-call.1} parent=0
    #allocation0 [shape = 's32[1]{0}', space=sflag, size = 0x4, scoped, tag = 'scoped memory for custom-call.1']
    %3 = vsyncpa [#allocation0], 0
    %s4 = sshll.u32 %s1, 4
    %s5 = int_to_ptr.vmem [resolvable:$true] %s4
    %7 = dma.hbm_to_vmem [thread:$0]  %s2, 256, %s5, [#allocation0]
    %8 = dma.done [#allocation0], 256
    %9 = vsyncpa [#allocation0], 1

// kernel: custom-call
$region0: #{custom-call}
  %s0 = inlined_call_operand.hbm [shape: c64[2,8,32], index: 0, kind: input, shape index: {}]
  %s1 = inlined_call_operand.vmem [shape: f32[2,8,32], index: 1, kind: output, shape index: {}]
  $region1: #{custom-call} parent=0
    #allocation0 [shape = 's32[1]{0}', space=sflag, size = 0x4, scoped, tag = 'scoped memory for custom-call']
    %2 = vsyncpa [#allocation0], 0
    %s3 = sshll.u32 %s1, 4
    %s4 = int_to_ptr.vmem [resolvable:$true] %s3
    %6 = dma.hbm_to_vmem [thread:$0]  %s0, 256, %s4, [#allocation0]
    %7 = dma.done [#allocation0], 256
    %8 = vsyncpa [#allocation0], 1

// kernel: custom-call.2
$region0: #{custom-call.2}
  %s0 = inlined_call_operand.vmem [shape: f32[2,8,32], index: 0, kind: input, shape index: {}]
  %s1 = inlined_call_operand.vmem [shape: f32[2,8,32], index: 1, kind: input, shape index: {}]
  %s2 = inlined_call_operand.hbm [shape: c64[2,8,32], index: 2, kind: output, shape index: {}]
  %s3 = scalar_lea.hbm %s2, 256
  $region1: #{custom-call.2} parent=0
    #allocation0 [shape = 's32[1]{0}', space=sflag, size = 0x4, scoped, tag = 'scoped memory for custom-call.2']
    %4 = vsyncpa [#allocation0], 0
    %s5 = sshll.u32 %s0, 4
    %s6 = int_to_ptr.vmem [resolvable:$true] %s5
    %8 = dma.vmem_to_hbm [thread:$0]  %s6, 256, %s2, [#allocation0]
    %9 = dma.done [#allocation0], 256
    %10 = vsyncpa [#allocation0], 1
  $region2: #{custom-call.2} parent=0
    #allocation1 [shape = 's32[1]{0}', space=sflag, size = 0x4, scoped, tag = 'scoped memory for custom-call.2']
    %11 = vsyncpa [#allocation1], 0
    %s12 = sshll.u32 %s1, 4
    %s13 = int_to_ptr.vmem [resolvable:$true] %s12
    %15 = dma.vmem_to_hbm [thread:$0]  %s13, 256, %s3, [#allocation1]
    %16 = dma.done [#allocation1], 256
    %17 = vsyncpa [#allocation1], 1

// kernel: _lambda_.1
$region0: #{_lambda_.1}
  #allocation0 [shape = 'u32[]', space=smem, size = 0x4, offset = 0x4, fixed_abs, tag = 'smem constant byte address 0x4 - core index']
  #allocation1 [shape = 'u32[144,128]{1,0:T(1,128)}', space=vmem, size = 0x12000, scoped, tag = 'internal scratch']
  %s0 = inlined_call_operand.vmem [shape: f32[16,128], index: 0, kind: input, shape index: {}]
  %s1 = inlined_call_operand.vmem [shape: f32[128,128], index: 1, kind: input, shape index: {}]
  %s2 = inlined_call_operand.vmem [shape: f32[1,128], index: 2, kind: input, shape index: {}]
  %s3 = inlined_call_operand.vmem [shape: f32[16,128], index: 3, kind: output, shape index: {}]
  %s4 = sld [smem:[#allocation0]]
  $region49: #{_lambda_.1} parent=0
    _
  %s6 = ssub.s32 1, %s4
  %s7 = scalar_select 0, %s6, %s4
  loop: start=0, step=1, limit=4
  $region2: #{_lambda_.1} parent=0 // loop_pre_header
    _
  $region3: #{_lambda_.1} parent=0 // loop_header
    %s9 = sphi 0, %s13
    %p10 = scmp.ge.s32.totalorder %s9, 4
    %s16 = sphi 0, %s35
    %s17 = sphi 0, %s31
    %s18 = sphi 0, %s27
    %s19 = sphi 0, %s16
    %s20 = sphi 0, %s17
    %s21 = sphi 0, %s18
    %s22 = sphi 0, %s19
    %s23 = sphi 0, %s20
    %s24 = sphi 0, %s21
    %s40 = sphi 0, %s42
    %s43 = sphi 0, %s40
    %s44 = sphi 0, %s43
    %s60 = sphi 0, %s44
    %s68 = sphi 0, %s70
    %s71 = sphi 0, %s68
    %s72 = sphi 0, %s71
    %s88 = sphi 0, %s72
    %s94 = sphi 0, %s96
    %s97 = sphi 0, %s94
    %s98 = sphi 0, %s97
    %s114 = sphi 0, %s98
    %s122 = sphi 0, %s124
    %s125 = sphi 0, %s122
    %s126 = sphi 0, %s125
    %s142 = sphi 0, %s126
  $region4: #{_lambda_.1} parent=0 // loop_header_branch
    %12 = sbr.rel (%p10) target = $region8
  $region5: #{_lambda_.1} parent=0 // loop_body
    %s14 = ssub.s32 %s9, 1
    %s15 = ssub.s32 %s9, 2
    %s25 = sadd.s32 1, %s18
    %p26 = scmp.ge.s32.totalorder %s25, 1
    %s27 = scalar_select %p26, 0, %s25
    %s28 = sadd.s32 1, %s17
    %s29 = scalar_select %p26, %s28, %s17
    %p30 = scmp.ge.s32.totalorder %s29, 1
    %s31 = scalar_select %p30, 0, %s29
    %s32 = sadd.s32 1, %s16
    %s33 = scalar_select %p30, %s32, %s16
    %p34 = scmp.ge.s32.totalorder %s33, 2
    %s35 = scalar_select %p34, 0, %s33
    %s36 = ssub.s32 %s16, %s35
    %s37 = ssub.s32 %s18, %s27
    %s38 = sor.u32 %s36, %s37
    %p39 = scmp.eq.s32.totalorder %s38, 0
    %s41 = sadd.s32 %s40, 1
    %s42 = scalar_select %p39, %s40, %s41
    %p45 = pneg %p39
    %p46 = scmp.eq.s32.totalorder %s9, 1
    %p47 = por %p45, %p46
    %p48 = scmp.ne.s32.totalorder %s40, %s43
    %p49 = scmp.eq.s32.totalorder %s9, 0
    %p50 = por %p48, %p49
    %p51 = scmp.ne.s32.totalorder %s40, %s43
    %p52 = scmp.eq.s32.totalorder %s14, 1
    %p53 = por %p51, %p52
    %p54 = scmp.ne.s32.totalorder %s43, %s44
    %p55 = scmp.eq.s32.totalorder %s14, 0
    %p56 = por %p54, %p55
    %p57 = scmp.ne.s32.totalorder %s43, %s44
    %p58 = scmp.eq.s32.totalorder %s15, 1
    %p59 = por %p57, %p58
    %p61 = scmp.ne.s32.totalorder %s44, %s60
    %p62 = scmp.eq.s32.totalorder %s15, 0
    %p63 = por %p61, %p62
    %s64 = ssub.s32 %s18, %s27
    %s65 = ssub.s32 %s17, %s31
    %s66 = sor.u32 %s64, %s65
    %p67 = scmp.eq.s32.totalorder %s66, 0
    %s69 = sadd.s32 %s68, 1
    %s70 = scalar_select %p67, %s68, %s69
    %p73 = pneg %p67
    %p74 = scmp.eq.s32.totalorder %s9, 1
    %p75 = por %p73, %p74
    %p76 = scmp.ne.s32.totalorder %s68, %s71
    %p77 = scmp.eq.s32.totalorder %s9, 0
    %p78 = por %p76, %p77
    %p79 = scmp.ne.s32.totalorder %s68, %s71
    %p80 = scmp.eq.s32.totalorder %s14, 1
    %p81 = por %p79, %p80
    %p82 = scmp.ne.s32.totalorder %s71, %s72
    %p83 = scmp.eq.s32.totalorder %s14, 0
    %p84 = por %p82, %p83
    %p85 = scmp.ne.s32.totalorder %s71, %s72
    %p86 = scmp.eq.s32.totalorder %s15, 1
    %p87 = por %p85, %p86
    %p89 = scmp.ne.s32.totalorder %s72, %s88
    %p90 = scmp.eq.s32.totalorder %s15, 0
    %p91 = por %p89, %p90
    %s92 = ssub.s32 %s17, %s31
    %p93 = scmp.eq.s32.totalorder %s92, 0
    %s95 = sadd.s32 %s94, 1
    %s96 = scalar_select %p93, %s94, %s95
    %p99 = pneg %p93
    %p100 = scmp.eq.s32.totalorder %s9, 1
    %p101 = por %p99, %p100
    %p102 = scmp.ne.s32.totalorder %s94, %s97
    %p103 = scmp.eq.s32.totalorder %s9, 0
    %p104 = por %p102, %p103
    %p105 = scmp.ne.s32.totalorder %s94, %s97
    %p106 = scmp.eq.s32.totalorder %s14, 1
    %p107 = por %p105, %p106
    %p108 = scmp.ne.s32.totalorder %s97, %s98
    %p109 = scmp.eq.s32.totalorder %s14, 0
    %p110 = por %p108, %p109
    %p111 = scmp.ne.s32.totalorder %s97, %s98
    %p112 = scmp.eq.s32.totalorder %s15, 1
    %p113 = por %p111, %p112
    %p115 = scmp.ne.s32.totalorder %s98, %s114
    %p116 = scmp.eq.s32.totalorder %s15, 0
    %p117 = por %p115, %p116
    %s118 = ssub.s32 %s16, %s35
    %s119 = ssub.s32 %s17, %s31
    %s120 = sor.u32 %s118, %s119
    %p121 = scmp.eq.s32.totalorder %s120, 0
    %s123 = sadd.s32 %s122, 1
    %s124 = scalar_select %p121, %s122, %s123
    %p127 = pneg %p121
    %p128 = scmp.eq.s32.totalorder %s9, 1
    %p129 = por %p127, %p128
    %p130 = scmp.ne.s32.totalorder %s122, %s125
    %p131 = scmp.eq.s32.totalorder %s9, 0
    %p132 = por %p130, %p131
    %p133 = scmp.ne.s32.totalorder %s122, %s125
    %p134 = scmp.eq.s32.totalorder %s14, 1
    %p135 = por %p133, %p134
    %p136 = scmp.ne.s32.totalorder %s125, %s126
    %p137 = scmp.eq.s32.totalorder %s14, 0
    %p138 = por %p136, %p137
    %p139 = scmp.ne.s32.totalorder %s125, %s126
    %p140 = scmp.eq.s32.totalorder %s15, 1
    %p141 = por %p139, %p140
    %p143 = scmp.ne.s32.totalorder %s126, %s142
    %p144 = scmp.eq.s32.totalorder %s15, 0
    %p145 = por %p143, %p144
    %p146 = scmp.le.s32.totalorder 1, %s9
    %p147 = scmp.lt.s32.totalorder %s9, 3
    %p148 = pnand %p146, %p147
    %p149 = pneg %p148
    // Predicated region
    $region9: #{_lambda_.1} parent=5 // pred_check
      _
    $region10: #{_lambda_.1} parent=5 // pred_check_branch
      %151 = sbr.rel (%p148) target = $region12
    $region11: #{_lambda_.1} parent=5 // pred_region
      %s152 = ssub.s32 %s9, 1
      // Predicated region
      $region13: #{_lambda_.1} parent=11 // pred_check
        %p153 = pneg %p84
      $region14: #{_lambda_.1} parent=11 // pred_check_branch
        %155 = sbr.rel (%p153) target = $region16
      $region15: #{_lambda_.1} parent=11 // pred_region
        %s156 = smul.u32 16, %s21
        %p157 = scmp.lt.s32.totalorder %s156, 15
        %s158 = scalar_select %p157, %s156, 15
        %p159 = scmp.lt.s32.totalorder %s20, 0
        %s160 = scalar_select %p159, %s20, 0
        %s161 = sadd.s32 %s160, %s158
        %s162 = smul.addr %s161, 8
        %s163 = scalar_lea.vmem %s1, %s162
        %s164 = smul.u32 16, %s21
      $region16: #{_lambda_.1} parent=11 // pred_fallthru
        _
      // Predicated region
      $region17: #{_lambda_.1} parent=11 // pred_check
        %p165 = pneg %p110
      $region18: #{_lambda_.1} parent=11 // pred_check_branch
        %167 = sbr.rel (%p165) target = $region20
      $region19: #{_lambda_.1} parent=11 // pred_region
        %p168 = scmp.lt.s32.totalorder %s20, 0
        %s169 = scalar_select %p168, %s20, 0
        %s170 = scalar_lea.vmem %s2, %s169
      $region20: #{_lambda_.1} parent=11 // pred_fallthru
        _
    $region12: #{_lambda_.1} parent=5 // pred_fallthru
      _
    %p171 = scmp.lt.s32.totalorder %s9, 2
    // Predicated region
    $region21: #{_lambda_.1} parent=5 // pred_check
      %p172 = pneg %p171
    $region22: #{_lambda_.1} parent=5 // pred_check_branch
      %174 = sbr.rel (%p172) target = $region24
    $region23: #{_lambda_.1} parent=5 // pred_region
      // Predicated region
      $region25: #{_lambda_.1} parent=23 // pred_check
        %p175 = pneg %p50
      $region26: #{_lambda_.1} parent=23 // pred_check_branch
        %177 = sbr.rel (%p175) target = $region28
      $region27: #{_lambda_.1} parent=23 // pred_region
        %p178 = scmp.lt.s32.totalorder %s16, 1
        %s179 = scalar_select %p178, %s16, 1
        %p180 = scmp.lt.s32.totalorder %s18, 0
        %s181 = scalar_select %p180, %s18, 0
        %s182 = sadd.s32 %s181, %s179
        %s183 = smul.addr %s182, 8
        %s184 = scalar_lea.vmem %s0, %s183
      $region28: #{_lambda_.1} parent=23 // pred_fallthru
        _
    $region24: #{_lambda_.1} parent=5 // pred_fallthru
      _
    %p185 = scmp.le.s32.totalorder 1, %s9
    %p186 = scmp.lt.s32.totalorder %s9, 3
    %p187 = pnand %p185, %p186
    %p188 = pneg %p187
    // Predicated region
    $region29: #{_lambda_.1} parent=5 // pred_check
      _
    $region30: #{_lambda_.1} parent=5 // pred_check_branch
      %190 = sbr.rel (%p187) target = $region32
    $region31: #{_lambda_.1} parent=5 // pred_region
      %s191 = ssub.s32 %s9, 1
      %p192 = scmp.lt.s32.totalorder %s19, 1
      %s193 = scalar_select %p192, %s19, 1
      %p194 = scmp.lt.s32.totalorder %s21, 0
      %s195 = scalar_select %p194, %s21, 0
      %s196 = sadd.s32 %s195, %s193
      %s197 = smul.addr %s196, 8
      %s198 = scalar_lea.vmem %s0, %s197
      %p199 = pneg %p56
      %p200 = pneg %p53
      %s201 = smul.u32 16, %s21
      %p202 = scmp.lt.s32.totalorder %s201, 15
      %s203 = scalar_select %p202, %s201, 15
      %p204 = scmp.lt.s32.totalorder %s20, 0
      %s205 = scalar_select %p204, %s20, 0
      %s206 = sadd.s32 %s205, %s203
      %s207 = smul.addr %s206, 8
      %s208 = scalar_lea.vmem %s1, %s207
      %p209 = pneg %p84
      %p210 = pneg %p81
      %p211 = scmp.lt.s32.totalorder %s20, 0
      %s212 = scalar_select %p211, %s20, 0
      %s213 = scalar_lea.vmem %s2, %s212
      %p214 = pneg %p110
      %p215 = pneg %p107
      %p216 = pneg %p138
      %p217 = pneg %p135
      %p218 = scmp.lt.s32.totalorder %s19, 1
      %s219 = scalar_select %p218, %s19, 1
      %p220 = scmp.lt.s32.totalorder %s20, 0
      %s221 = scalar_select %p220, %s20, 0
      %s222 = sadd.s32 %s221, %s219
      %s223 = smul.addr %s222, 8
      %s224 = scalar_lea.vmem %s3, %s223
      %p225 = scmp.lt.s32.totalorder %s19, 1
      %s226 = scalar_select %p225, %s19, 1
      %p227 = scmp.lt.s32.totalorder %s21, 0
      %s228 = scalar_select %p227, %s21, 0
      %s229 = sadd.s32 %s228, %s226
      %s230 = smul.addr %s229, 8
      %s231 = scalar_lea.vmem %s0, %s230
      %s232 = smul.u32 16, %s21
      %p233 = scmp.lt.s32.totalorder %s232, 15
      %s234 = scalar_select %p233, %s232, 15
      %p235 = scmp.lt.s32.totalorder %s20, 0
      %s236 = scalar_select %p235, %s20, 0
      %s237 = sadd.s32 %s236, %s234
      %s238 = smul.addr %s237, 8
      %s239 = scalar_lea.vmem %s1, %s238
      %s240 = smul.u32 16, %s21
      %p241 = scmp.lt.s32.totalorder %s20, 0
      %s242 = scalar_select %p241, %s20, 0
      %s243 = scalar_lea.vmem %s2, %s242
      %p244 = scmp.lt.s32.totalorder %s19, 1
      %s245 = scalar_select %p244, %s19, 1
      %p246 = scmp.lt.s32.totalorder %s20, 0
      %s247 = scalar_select %p246, %s20, 0
      %s248 = sadd.s32 %s247, %s245
      %s249 = smul.addr %s248, 8
      %s250 = scalar_lea.vmem %s3, %s249
      %p251 = scmp.eq.s32.totalorder %s21, 0
      // Predicated region
      $region33: #{_lambda_.1} parent=31 // pred_check
        %p252 = pneg %p251
      $region34: #{_lambda_.1} parent=31 // pred_check_branch
        %254 = sbr.rel (%p252) target = $region36
      $region35: #{_lambda_.1} parent=31 // pred_region
        %v255 = vld [vmem:[%s243] sm:$0x1]
        %v257 = vlaneseq
        %v258 = vshrl.u32 %v257, 7
        %v259 = vsub.s32 0, %v258
        %v260 = vrot.slane %v255, %v259
        %262 = vst [vmem:[%s250] sm:$0xff] %v260
      $region36: #{_lambda_.1} parent=31 // pred_fallthru
        _
      %v263 = vld [vmem:[%s250] sm:$0xff]
      %v264 = vld [vmem:[%s231] sm:$0xff]
      %v265 = vld [vmem:[%s239] sm:$0xff]
      %v266 = vld [vmem:[%s239 + $0x8] sm:$0xff]
      %v267 = vld [vmem:[%s239 + $0x10] sm:$0xff]
      %v268 = vld [vmem:[%s239 + $0x18] sm:$0xff]
      %v269 = vld [vmem:[%s239 + $0x20] sm:$0xff]
      %v270 = vld [vmem:[%s239 + $0x28] sm:$0xff]
      %v271 = vld [vmem:[%s239 + $0x30] sm:$0xff]
      %v272 = vld [vmem:[%s239 + $0x38] sm:$0xff]
      %v273 = vld [vmem:[%s239 + $0x40] sm:$0xff]
      %v274 = vld [vmem:[%s239 + $0x48] sm:$0xff]
      %v275 = vld [vmem:[%s239 + $0x50] sm:$0xff]
      %v276 = vld [vmem:[%s239 + $0x58] sm:$0xff]
      %v277 = vld [vmem:[%s239 + $0x60] sm:$0xff]
      %v278 = vld [vmem:[%s239 + $0x68] sm:$0xff]
      %v279 = vld [vmem:[%s239 + $0x70] sm:$0xff]
      %v280 = vld [vmem:[%s239 + $0x78] sm:$0xff]
      %281 = vmatprep.subr.mxu0 0.0
      %282 = vmatpush1.msra.mxu0 %v265
      %283 = vmatprep.subr.mxu0 0.0
      %284 = vmatpush1.msra.mxu0 %v266
      %285 = vmatprep.subr.mxu0 0.0
      %286 = vmatpush1.msra.mxu0 %v267
      %287 = vmatprep.subr.mxu0 0.0
      %288 = vmatpush1.msra.mxu0 %v268
      %289 = vmatprep.subr.mxu0 0.0
      %290 = vmatpush1.msra.mxu0 %v269
      %291 = vmatprep.subr.mxu0 0.0
      %292 = vmatpush1.msra.mxu0 %v270
      %293 = vmatprep.subr.mxu0 0.0
      %294 = vmatpush1.msra.mxu0 %v271
      %295 = vmatprep.subr.mxu0 0.0
      %296 = vmatpush1.msra.mxu0 %v272
      %297 = vmatprep.subr.mxu0 0.0
      %298 = vmatpush1.msra.mxu0 %v273
      %299 = vmatprep.subr.mxu0 0.0
      %300 = vmatpush1.msra.mxu0 %v274
      %301 = vmatprep.subr.mxu0 0.0
      %302 = vmatpush1.msra.mxu0 %v275
      %303 = vmatprep.subr.mxu0 0.0
      %304 = vmatpush1.msra.mxu0 %v276
      %305 = vmatprep.subr.mxu0 0.0
      %306 = vmatpush1.msra.mxu0 %v277
      %307 = vmatprep.subr.mxu0 0.0
      %308 = vmatpush1.msra.mxu0 %v278
      %309 = vmatprep.subr.mxu0 0.0
      %310 = vmatpush1.msra.mxu0 %v279
      %311 = vmatprep.subr.mxu0 0.0
      %312 = vmatpush1.msra.mxu0 %v280
      %313 = vmatprep.subr.mxu0 0.0
      %314 = vmatpush1.msra.mxu0 0.0
      %315 = vmatprep.subr.mxu0 0.0
      %316 = vmatpush1.msra.mxu0 0.0
      %317 = vmatprep.subr.mxu0 0.0
      %318 = vmatpush1.msra.mxu0 0.0
      %319 = vmatprep.subr.mxu0 0.0
      %320 = vmatpush1.msra.mxu0 0.0
      %321 = vmatprep.subr.mxu0 0.0
      %322 = vmatpush1.msra.mxu0 0.0
      %323 = vmatprep.subr.mxu0 0.0
      %324 = vmatpush1.msra.mxu0 0.0
      %325 = vmatprep.subr.mxu0 0.0
      %326 = vmatpush1.msra.mxu0 0.0
      %327 = vmatprep.subr.mxu0 0.0
      %328 = vmatpush1.msra.mxu0 0.0
      %329 = vmatprep.subr.mxu0 0.0
      %330 = vmatpush1.msra.mxu0 0.0
      %331 = vmatprep.subr.mxu0 0.0
      %332 = vmatpush1.msra.mxu0 0.0
      %333 = vmatprep.subr.mxu0 0.0
      %334 = vmatpush1.msra.mxu0 0.0
      %335 = vmatprep.subr.mxu0 0.0
      %336 = vmatpush1.msra.mxu0 0.0
      %337 = vmatprep.subr.mxu0 0.0
      %338 = vmatpush1.msra.mxu0 0.0
      %339 = vmatprep.subr.mxu0 0.0
      %340 = vmatpush1.msra.mxu0 0.0
      %341 = vmatprep.subr.mxu0 0.0
      %342 = vmatpush1.msra.mxu0 0.0
      %343 = vmatprep.subr.mxu0 0.0
      %344 = vmatpush1.msra.mxu0 0.0
      %345 = vmatprep.mubr.f32.mxu0 0.0
      %346 = vmatmul.mubr.f32.gmra.mrb[0].mxu0 %v264
      %v347 = vpop.f32.mrb[0].mxu0
      %v348 = vadd.f32 0.0, %v347
      %v349 = vpop.f32.mrb[0].mxu0
      %350 = vdwg.mxu0
      %v351 = vadd.f32 %v263, %v348
      %352 = vst [vmem:[%s250] sm:$0xff] %v351
      %p353 = scmp.lt.s32.totalorder %s19, 1
      %s354 = scalar_select %p353, %s19, 1
      %p355 = scmp.lt.s32.totalorder %s20, 0
      %s356 = scalar_select %p355, %s20, 0
      %s357 = sadd.s32 %s356, %s354
      %s358 = smul.addr %s357, 8
      %s359 = scalar_lea.vmem %s3, %s358
      // Predicated region
      $region37: #{_lambda_.1} parent=31 // pred_check
        %p360 = pneg %p135
      $region38: #{_lambda_.1} parent=31 // pred_check_branch
        %362 = sbr.rel (%p360) target = $region40
      $region39: #{_lambda_.1} parent=31 // pred_region
        _
      $region40: #{_lambda_.1} parent=31 // pred_fallthru
        _
    $region32: #{_lambda_.1} parent=5 // pred_fallthru
      _
    %p363 = scmp.le.s32.totalorder 2, %s9
    // Predicated region
    $region41: #{_lambda_.1} parent=5 // pred_check
      %p364 = pneg %p363
    $region42: #{_lambda_.1} parent=5 // pred_check_branch
      %366 = sbr.rel (%p364) target = $region44
    $region43: #{_lambda_.1} parent=5 // pred_region
      %s367 = ssub.s32 %s9, 2
      // Predicated region
      $region45: #{_lambda_.1} parent=43 // pred_check
        %p368 = pneg %p141
      $region46: #{_lambda_.1} parent=43 // pred_check_branch
        %370 = sbr.rel (%p368) target = $region48
      $region47: #{_lambda_.1} parent=43 // pred_region
        %p371 = scmp.lt.s32.totalorder %s22, 1
        %s372 = scalar_select %p371, %s22, 1
        %p373 = scmp.lt.s32.totalorder %s23, 0
        %s374 = scalar_select %p373, %s23, 0
        %s375 = sadd.s32 %s374, %s372
        %s376 = smul.addr %s375, 8
        %s377 = scalar_lea.vmem %s3, %s376
      $region48: #{_lambda_.1} parent=43 // pred_fallthru
        _
    $region44: #{_lambda_.1} parent=5 // pred_fallthru
      _
  $region6: #{_lambda_.1} parent=0 // loop_footer
    %s13 = sadd.s32 1, %s9
  $region7: #{_lambda_.1} parent=0 // loop_footer_branch
    %8 = sbr.rel target = $region3
  $region8: #{_lambda_.1} parent=0 // loop_exit
    _

</llo_original>
